<compile_context>
chip_gen: v5e
topology: v5e:2x2
jax: 0.10.0
libtpu: 0.0.40
codegen_flags: <defaults>
</compile_context>

<pallas_src>
import functools

import jax
import jax.numpy as jnp
import numpy as np
from jax.experimental import pallas as pl
from jax.experimental.pallas import tpu as pltpu

LANE = 128


def _round_up(x, m):
    return ((x + m - 1) // m) * m


def _vmem_capacity_bytes():
    try:
        return int(pltpu.get_tpu_info().vmem_capacity_bytes)
    except Exception:
        return 64 * 2**20  # conservative fallback: v7x per-TensorCore VMEM


# -----------------------------------------------------------------------------
# Pallas kernel: the entire SIREN MLP for one tile of rows.
# -----------------------------------------------------------------------------
def siren_kernel(*refs, num_layers):
    """refs = (x, w_first, b_first, [w_hidden, b_hidden,] w_last, b_last,
               out, h_scratch).  w0 / coords_scaler are pre-folded into the
    weights and biases; biases are f32; h_scratch dtype = weight dtype."""
    if num_layers > 0:
        (x_ref, wf_ref, bf_ref, wh_ref, bh_ref,
         wl_ref, bl_ref, o_ref, h_ref) = refs
    else:
        x_ref, wf_ref, bf_ref, wl_ref, bl_ref, o_ref, h_ref = refs
        wh_ref = bh_ref = None

    act_dtype = h_ref.dtype

    def mm(a, w):
        # MXU matmul with f32 accumulation; `a` already matches w's dtype
        # family (f32 first layer, bf16/f32 scratch for the rest).
        return jnp.dot(a, w, preferred_element_type=jnp.float32)

    # First sine layer in f32: sin(x @ (first_w0*scaler*W^T) + first_w0*b).
    h_ref[...] = jnp.sin(mm(x_ref[...], wf_ref[...])
                         + bf_ref[...]).astype(act_dtype)

    # Hidden sine layers (w0 folded); static unroll over stacked weights.
    for i in range(num_layers):
        h_ref[...] = jnp.sin(mm(h_ref[...], wh_ref[i])
                             + bh_ref[i]).astype(act_dtype)

    # Final linear layer (last_linear=True), lane-padded output columns.
    o_ref[...] = (mm(h_ref[...], wl_ref[...]) + bl_ref[...]).astype(o_ref.dtype)


# -----------------------------------------------------------------------------
# Parameter init (mirrors the PyTorch __init__ distributions)
# -----------------------------------------------------------------------------
def init_siren_params(key, dim_in, dim_out, num_layers, dim_hidden,
                      first_w0, hidden_w0):
    keys = jax.random.split(key, 2 * (num_layers + 2))
    kit = iter(keys)

    def uniform(k, shape, bound):
        return jax.random.uniform(k, shape, jnp.float32, -bound, bound)

    # first sine layer: weight std 1/dim_in ; bias default Linear 1/sqrt(fan_in)
    w_first = uniform(next(kit), (dim_in, dim_hidden), 1.0 / dim_in)      # W^T
    b_first = uniform(next(kit), (1, dim_hidden), 1.0 / np.sqrt(dim_in))

    # hidden sine layers: std sqrt(6/dim_hidden)/hidden_w0
    std_h = np.sqrt(6.0 / dim_hidden) / hidden_w0
    if num_layers > 0:
        w_hidden = jnp.stack([uniform(next(kit), (dim_hidden, dim_hidden), std_h)
                              for _ in range(num_layers)])
        b_hidden = jnp.stack([uniform(next(kit), (1, dim_hidden),
                                      1.0 / np.sqrt(dim_hidden))
                              for _ in range(num_layers)])
    else:
        w_hidden = jnp.zeros((0, dim_hidden, dim_hidden), jnp.float32)
        b_hidden = jnp.zeros((0, 1, dim_hidden), jnp.float32)

    # final linear layer
    w_last = uniform(next(kit), (dim_hidden, dim_out), std_h)
    b_last = uniform(next(kit), (1, dim_out), 1.0 / np.sqrt(dim_hidden))

    return dict(w_first=w_first, b_first=b_first,
                w_hidden=w_hidden, b_hidden=b_hidden,
                w_last=w_last, b_last=b_last)


# -----------------------------------------------------------------------------
# Fold w0 / coords_scaler into params, lane-pad dim_hidden and dim_out,
# cast hidden/last weights to bf16 (first layer stays f32).
# -----------------------------------------------------------------------------
def prepare_siren_params(params, *, first_w0, hidden_w0, coords_scaler,
                         use_bf16=True):
    dim_in, dim_hidden = params["w_first"].shape
    dim_out = params["w_last"].shape[1]
    h_pad = _round_up(dim_hidden, LANE)
    o_pad = _round_up(dim_out, LANE)
    hp = h_pad - dim_hidden
    op = o_pad - dim_out
    wdtype = jnp.bfloat16 if use_bf16 else jnp.float32

    # First layer kept in f32: tiny-K matmul, and avoids bf16 rounding of the
    # w0-amplified pre-activation going into sin.
    w_first = jnp.pad(params["w_first"] * (first_w0 * coords_scaler),
                      ((0, 0), (0, hp))).astype(jnp.float32)
    b_first = jnp.pad(params["b_first"] * first_w0,
                      ((0, 0), (0, hp))).astype(jnp.float32)

    num_layers = params["w_hidden"].shape[0]
    if num_layers > 0:
        w_hidden = jnp.pad(params["w_hidden"] * hidden_w0,
                           ((0, 0), (0, hp), (0, hp))).astype(wdtype)
        b_hidden = jnp.pad(params["b_hidden"] * hidden_w0,
                           ((0, 0), (0, 0), (0, hp))).astype(jnp.float32)
    else:
        w_hidden = jnp.zeros((0, h_pad, h_pad), wdtype)
        b_hidden = jnp.zeros((0, 1, h_pad), jnp.float32)

    # Last layer: zero-pad the output dim to 128 lanes -> unmasked vst.
    w_last = jnp.pad(params["w_last"], ((0, hp), (0, op))).astype(wdtype)
    b_last = jnp.pad(params["b_last"], ((0, 0), (0, op))).astype(jnp.float32)

    return dict(w_first=w_first, b_first=b_first,
                w_hidden=w_hidden, b_hidden=b_hidden,
                w_last=w_last, b_last=b_last,
                dim_out=int(dim_out))


# -----------------------------------------------------------------------------
# Wrapper: flatten rows, tile over N, call the kernel
# -----------------------------------------------------------------------------
def siren_forward(coords, prep, *, row_tile=1024, vmem_limit_bytes=None):
    orig_shape = coords.shape
    dim_in = orig_shape[-1]
    h_pad = prep["w_first"].shape[1]
    out_pad = prep["w_last"].shape[1]
    dim_out = prep["dim_out"]
    num_layers = int(prep["w_hidden"].shape[0])
    act_dtype = prep["w_last"].dtype          # bf16 (or f32 when use_bf16=False)
    act_bytes = jnp.dtype(act_dtype).itemsize

    x = coords.reshape(-1, dim_in).astype(jnp.float32)
    n = x.shape[0]

    weight_args = [prep["w_first"], prep["b_first"]]
    if num_layers > 0:
        weight_args += [prep["w_hidden"], prep["b_hidden"]]
    weight_args += [prep["w_last"], prep["b_last"]]
    weight_bytes = sum(int(np.prod(a.shape)) * a.dtype.itemsize
                       for a in weight_args)

    cap = _vmem_capacity_bytes()
    budget = max(16 * 2**20, cap - 16 * 2**20)   # headroom for Mosaic internals

    def vmem_need(rt):
        return (weight_bytes
                + 2 * rt * dim_in * 4       # double-buffered input tile
                + 2 * rt * out_pad * 4      # double-buffered output tile
                + rt * h_pad * act_bytes)   # activation scratch

    # Adaptive row tile: multiple of 8, never (much) larger than N, at least
    # two grid tiles when possible (keeps both v7x TensorCores busy — costs
    # only ~0.35 us on single-core chips), and within the VMEM budget.
    rt = max(8, min(int(row_tile), _round_up(n, 8)))
    if n > 8:
        rt = max(8, min(rt, _round_up(pl.cdiv(n, 2), 8)))
    while rt > 8 and vmem_need(rt) > budget:
        rt = max(8, _round_up(rt // 2, 8))

    grid = (pl.cdiv(n, rt),)

    # Weights/biases: whole-array, single copy resident in VMEM.
    resident = pl.BlockSpec(memory_space=pltpu.MemorySpace.VMEM)
    in_specs = ([pl.BlockSpec((rt, dim_in), lambda i: (i, 0))]
                + [resident] * len(weight_args))
    out_spec = pl.BlockSpec((rt, out_pad), lambda i: (i, 0))

    flops = 2 * n * (dim_in * h_pad + num_layers * h_pad * h_pad
                     + h_pad * out_pad)
    transcendentals = n * h_pad * (num_layers + 1)
    bytes_accessed = n * dim_in * 4 + n * out_pad * 4 + weight_bytes

    if vmem_limit_bytes is None:
        vmem_limit_bytes = int(min(max(32 * 2**20,
                                       vmem_need(rt) + 16 * 2**20), cap))

    kernel = functools.partial(siren_kernel, num_layers=num_layers)

    out = pl.pallas_call(
        kernel,
        out_shape=jax.ShapeDtypeStruct((n, out_pad), jnp.float32),
        grid=grid,
        in_specs=in_specs,
        out_specs=out_spec,
        scratch_shapes=[pltpu.VMEM((rt, h_pad), act_dtype)],
        compiler_params=pltpu.CompilerParams(
            dimension_semantics=("parallel",),
            vmem_limit_bytes=vmem_limit_bytes),
        cost_estimate=pl.CostEstimate(flops=int(flops),
                                      transcendentals=int(transcendentals),
                                      bytes_accessed=int(bytes_accessed)),
    )(x, *weight_args)

    out = out[:, :dim_out]
    return out.reshape(*orig_shape[:-1], dim_out)


# -----------------------------------------------------------------------------
# References
# -----------------------------------------------------------------------------
def siren_reference_prepared(coords, prep):
    """Pure-JAX mirror of the kernel math (folded params, same dtype casts)."""
    dim_in = coords.shape[-1]
    dim_out = prep["dim_out"]
    act_dtype = prep["w_last"].dtype
    x = coords.reshape(-1, dim_in).astype(jnp.float32)

    def mm(a, w):
        return jnp.dot(a, w, preferred_element_type=jnp.float32)

    h = jnp.sin(mm(x, prep["w_first"]) + prep["b_first"]).astype(act_dtype)
    for i in range(prep["w_hidden"].shape[0]):
        h = jnp.sin(mm(h, prep["w_hidden"][i]) + prep["b_hidden"][i]).astype(act_dtype)
    out = (mm(h, prep["w_last"]) + prep["b_last"])[:, :dim_out]
    return out.reshape(*coords.shape[:-1], dim_out)


def siren_reference_f32(coords, params, *, first_w0, hidden_w0, coords_scaler):
    """Faithful f32 math of the PyTorch module (no folding, no bf16)."""
    hp = jax.lax.Precision.HIGHEST
    x = coords.astype(jnp.float32) * coords_scaler
    h = jnp.sin(first_w0 * (jnp.dot(x, params["w_first"], precision=hp)
                            + params["b_first"][0]))
    for i in range(params["w_hidden"].shape[0]):
        h = jnp.sin(hidden_w0 * (jnp.dot(h, params["w_hidden"][i], precision=hp)
                                 + params["b_hidden"][i, 0]))
    return jnp.dot(h, params["w_last"], precision=hp) + params["b_last"][0]


if __name__ == "__main__":
    # Small SIREN config: coords [bsz, nsmpl, dim_in]
    bsz, nsmpl = 2, 8
    dim_in, dim_out = 3, 4
    dim_hidden = 32
    num_layers = 2
    first_w0, hidden_w0 = 30.0, 30.0
    coords_scaler = 1.0

    key = jax.random.PRNGKey(0)
    k_coords, k_params = jax.random.split(key)

    coords = jax.random.uniform(k_coords, (bsz, nsmpl, dim_in),
                                jnp.float32, -1.0, 1.0)
    params = init_siren_params(k_params, dim_in, dim_out, num_layers,
                               dim_hidden, first_w0, hidden_w0)
    prep = prepare_siren_params(params, first_w0=first_w0, hidden_w0=hidden_w0,
                                coords_scaler=coords_scaler, use_bf16=True)

    out = siren_forward(coords, prep)
    out = jax.block_until_ready(out)
    assert out.shape == (bsz, nsmpl, dim_out)

    # 1) Exact-math mirror (same folded params / bf16 casts): validates the
    #    Pallas plumbing tightly.
    ref_mirror = siren_reference_prepared(coords, prep)
    np.testing.assert_allclose(np.asarray(out), np.asarray(ref_mirror),
                               rtol=1e-2, atol=1e-2)

    # 2) Faithful f32 PyTorch-style math: loose tolerance because the hidden
    #    layers use bf16 MXU inputs (f32 accumulation) by design.
    ref_f32 = siren_reference_f32(coords, params, first_w0=first_w0,
                                  hidden_w0=hidden_w0,
                                  coords_scaler=coords_scaler)
    np.testing.assert_allclose(np.asarray(out), np.asarray(ref_f32),
                               rtol=0.1, atol=0.1)

    print("KERNEL_OK")
</pallas_src>

<mosaic_0001>
module attributes {stable_mosaic.version = 11 : i64} {
  func.func @siren_kernel(%arg0: i32, %arg1: memref<8x3xf32, #tpu.memory_space<vmem>>, %arg2: memref<3x128xf32, #tpu.memory_space<vmem>>, %arg3: memref<1x128xf32, #tpu.memory_space<vmem>>, %arg4: memref<2x128x128xbf16, #tpu.memory_space<vmem>>, %arg5: memref<2x1x128xf32, #tpu.memory_space<vmem>>, %arg6: memref<128x128xbf16, #tpu.memory_space<vmem>>, %arg7: memref<1x128xf32, #tpu.memory_space<vmem>>, %arg8: memref<8x128xf32, #tpu.memory_space<vmem>>, %arg9: memref<8x128xbf16, #tpu.memory_space<vmem>>) attributes {dimension_semantics = [#tpu.dimension_semantics<parallel>], iteration_bounds = array<i64: 2>, scalar_prefetch = 0 : i64, scratch_operands = 1 : i64, tpu.core_type = #tpu.core_type<tc>, window_params = [{transform_indices = @transform_0, window_bounds = array<i64: 8, 3>}, {pipeline_mode = #tpu.pipeline_mode<synchronous>, transform_indices = @transform_1, window_bounds = array<i64: 3, 128>}, {pipeline_mode = #tpu.pipeline_mode<synchronous>, transform_indices = @transform_2, window_bounds = array<i64: 1, 128>}, {pipeline_mode = #tpu.pipeline_mode<synchronous>, transform_indices = @transform_3, window_bounds = array<i64: 2, 128, 128>}, {pipeline_mode = #tpu.pipeline_mode<synchronous>, transform_indices = @transform_4, window_bounds = array<i64: 2, 1, 128>}, {pipeline_mode = #tpu.pipeline_mode<synchronous>, transform_indices = @transform_5, window_bounds = array<i64: 128, 128>}, {pipeline_mode = #tpu.pipeline_mode<synchronous>, transform_indices = @transform_6, window_bounds = array<i64: 1, 128>}, {transform_indices = @transform_7, window_bounds = array<i64: 8, 128>}]} {
    %c0 = arith.constant 0 : index
    %c0_0 = arith.constant 0 : index
    %0 = vector.load %arg1[%c0, %c0_0] : memref<8x3xf32, #tpu.memory_space<vmem>>, vector<8x3xf32>
    %c0_1 = arith.constant 0 : index
    %c0_2 = arith.constant 0 : index
    %1 = vector.load %arg2[%c0_1, %c0_2] : memref<3x128xf32, #tpu.memory_space<vmem>>, vector<3x128xf32>
    %cst = arith.constant dense<0.000000e+00> : vector<8x128xf32>
    %2 = tpu.matmul %0, %1, %cst {dimension_numbers = #tpu.dot_dimension_numbers<[1], [0], [0], [1], [0, 0, 1, 1], [], []>} : vector<8x3xf32>, vector<3x128xf32>, vector<8x128xf32> -> vector<8x128xf32>
    %c0_3 = arith.constant 0 : index
    %c0_4 = arith.constant 0 : index
    %3 = vector.load %arg3[%c0_3, %c0_4] : memref<1x128xf32, #tpu.memory_space<vmem>>, vector<1x128xf32>
    %4 = vector.broadcast %3 : vector<1x128xf32> to vector<8x128xf32>
    %5 = arith.addf %2, %4 : vector<8x128xf32>
    %6 = math.sin %5 : vector<8x128xf32>
    %7 = arith.truncf %6 : vector<8x128xf32> to vector<8x128xbf16>
    %c0_5 = arith.constant 0 : index
    %c0_6 = arith.constant 0 : index
    %8 = vector.load %arg9[%c0_5, %c0_6] : memref<8x128xbf16, #tpu.memory_space<vmem>>, vector<8x128xbf16>
    tpu.vector_store %arg9[%c0_5, %c0_6], %7 {strides = array<i32>} : memref<8x128xbf16, #tpu.memory_space<vmem>>, vector<8x128xbf16>,
    %c0_7 = arith.constant 0 : index
    %c0_8 = arith.constant 0 : index
    %9 = vector.load %arg9[%c0_7, %c0_8] : memref<8x128xbf16, #tpu.memory_space<vmem>>, vector<8x128xbf16>
    %c0_9 = arith.constant 0 : index
    %c0_10 = arith.constant 0 : index
    %c0_11 = arith.constant 0 : index
    %10 = vector.load %arg4[%c0_9, %c0_10, %c0_11] : memref<2x128x128xbf16, #tpu.memory_space<vmem>>, vector<1x128x128xbf16>
    %11 = vector.shape_cast %10 : vector<1x128x128xbf16> to vector<128x128xbf16>
    %cst_12 = arith.constant dense<0.000000e+00> : vector<8x128xf32>
    %12 = tpu.matmul %9, %11, %cst_12 {dimension_numbers = #tpu.dot_dimension_numbers<[1], [0], [0], [1], [0, 0, 1, 1], [], []>} : vector<8x128xbf16>, vector<128x128xbf16>, vector<8x128xf32> -> vector<8x128xf32>
    %c0_13 = arith.constant 0 : index
    %c0_14 = arith.constant 0 : index
    %c0_15 = arith.constant 0 : index
    %13 = vector.load %arg5[%c0_13, %c0_14, %c0_15] : memref<2x1x128xf32, #tpu.memory_space<vmem>>, vector<1x1x128xf32>
    %14 = vector.shape_cast %13 : vector<1x1x128xf32> to vector<1x128xf32>
    %15 = vector.broadcast %14 : vector<1x128xf32> to vector<8x128xf32>
    %16 = arith.addf %12, %15 : vector<8x128xf32>
    %17 = math.sin %16 : vector<8x128xf32>
    %18 = arith.truncf %17 : vector<8x128xf32> to vector<8x128xbf16>
    %c0_16 = arith.constant 0 : index
    %c0_17 = arith.constant 0 : index
    %19 = vector.load %arg9[%c0_16, %c0_17] : memref<8x128xbf16, #tpu.memory_space<vmem>>, vector<8x128xbf16>
    tpu.vector_store %arg9[%c0_16, %c0_17], %18 {strides = array<i32>} : memref<8x128xbf16, #tpu.memory_space<vmem>>, vector<8x128xbf16>,
    %c0_18 = arith.constant 0 : index
    %c0_19 = arith.constant 0 : index
    %20 = vector.load %arg9[%c0_18, %c0_19] : memref<8x128xbf16, #tpu.memory_space<vmem>>, vector<8x128xbf16>
    %c1 = arith.constant 1 : index
    %c0_20 = arith.constant 0 : index
    %c0_21 = arith.constant 0 : index
    %21 = vector.load %arg4[%c1, %c0_20, %c0_21] : memref<2x128x128xbf16, #tpu.memory_space<vmem>>, vector<1x128x128xbf16>
    %22 = vector.shape_cast %21 : vector<1x128x128xbf16> to vector<128x128xbf16>
    %cst_22 = arith.constant dense<0.000000e+00> : vector<8x128xf32>
    %23 = tpu.matmul %20, %22, %cst_22 {dimension_numbers = #tpu.dot_dimension_numbers<[1], [0], [0], [1], [0, 0, 1, 1], [], []>} : vector<8x128xbf16>, vector<128x128xbf16>, vector<8x128xf32> -> vector<8x128xf32>
    %c1_23 = arith.constant 1 : index
    %c0_24 = arith.constant 0 : index
    %c0_25 = arith.constant 0 : index
    %24 = vector.load %arg5[%c1_23, %c0_24, %c0_25] : memref<2x1x128xf32, #tpu.memory_space<vmem>>, vector<1x1x128xf32>
    %25 = vector.shape_cast %24 : vector<1x1x128xf32> to vector<1x128xf32>
    %26 = vector.broadcast %25 : vector<1x128xf32> to vector<8x128xf32>
    %27 = arith.addf %23, %26 : vector<8x128xf32>
    %28 = math.sin %27 : vector<8x128xf32>
    %29 = arith.truncf %28 : vector<8x128xf32> to vector<8x128xbf16>
    %c0_26 = arith.constant 0 : index
    %c0_27 = arith.constant 0 : index
    %30 = vector.load %arg9[%c0_26, %c0_27] : memref<8x128xbf16, #tpu.memory_space<vmem>>, vector<8x128xbf16>
    tpu.vector_store %arg9[%c0_26, %c0_27], %29 {strides = array<i32>} : memref<8x128xbf16, #tpu.memory_space<vmem>>, vector<8x128xbf16>,
    %c0_28 = arith.constant 0 : index
    %c0_29 = arith.constant 0 : index
    %31 = vector.load %arg9[%c0_28, %c0_29] : memref<8x128xbf16, #tpu.memory_space<vmem>>, vector<8x128xbf16>
    %c0_30 = arith.constant 0 : index
    %c0_31 = arith.constant 0 : index
    %32 = vector.load %arg6[%c0_30, %c0_31] : memref<128x128xbf16, #tpu.memory_space<vmem>>, vector<128x128xbf16>
    %cst_32 = arith.constant dense<0.000000e+00> : vector<8x128xf32>
    %33 = tpu.matmul %31, %32, %cst_32 {dimension_numbers = #tpu.dot_dimension_numbers<[1], [0], [0], [1], [0, 0, 1, 1], [], []>} : vector<8x128xbf16>, vector<128x128xbf16>, vector<8x128xf32> -> vector<8x128xf32>
    %c0_33 = arith.constant 0 : index
    %c0_34 = arith.constant 0 : index
    %34 = vector.load %arg7[%c0_33, %c0_34] : memref<1x128xf32, #tpu.memory_space<vmem>>, vector<1x128xf32>
    %35 = vector.broadcast %34 : vector<1x128xf32> to vector<8x128xf32>
    %36 = arith.addf %33, %35 : vector<8x128xf32>
    %c0_35 = arith.constant 0 : index
    %c0_36 = arith.constant 0 : index
    %37 = vector.load %arg8[%c0_35, %c0_36] : memref<8x128xf32, #tpu.memory_space<vmem>>, vector<8x128xf32>
    tpu.vector_store %arg8[%c0_35, %c0_36], %36 {strides = array<i32>} : memref<8x128xf32, #tpu.memory_space<vmem>>, vector<8x128xf32>,
    return
  }
  func.func @transform_0(%arg0: i32) -> (i32, i32) {
    %c0_i32 = arith.constant 0 : i32
    %c0_i32_0 = arith.constant 0 : i32
    return %arg0, %c0_i32 : i32, i32
  }
  func.func @transform_1(%arg0: i32) -> (i32, i32) {
    %c0_i32 = arith.constant 0 : i32
    %c0_i32_0 = arith.constant 0 : i32
    %c0_i32_1 = arith.constant 0 : i32
    return %c0_i32, %c0_i32_0 : i32, i32
  }
  func.func @transform_2(%arg0: i32) -> (i32, i32) {
    %c0_i32 = arith.constant 0 : i32
    %c0_i32_0 = arith.constant 0 : i32
    %c0_i32_1 = arith.constant 0 : i32
    return %c0_i32, %c0_i32_0 : i32, i32
  }
  func.func @transform_3(%arg0: i32) -> (i32, i32, i32) {
    %c0_i32 = arith.constant 0 : i32
    %c0_i32_0 = arith.constant 0 : i32
    %c0_i32_1 = arith.constant 0 : i32
    %c0_i32_2 = arith.constant 0 : i32
    return %c0_i32, %c0_i32_0, %c0_i32_1 : i32, i32, i32
  }
  func.func @transform_4(%arg0: i32) -> (i32, i32, i32) {
    %c0_i32 = arith.constant 0 : i32
    %c0_i32_0 = arith.constant 0 : i32
    %c0_i32_1 = arith.constant 0 : i32
    %c0_i32_2 = arith.constant 0 : i32
    return %c0_i32, %c0_i32_0, %c0_i32_1 : i32, i32, i32
  }
  func.func @transform_5(%arg0: i32) -> (i32, i32) {
    %c0_i32 = arith.constant 0 : i32
    %c0_i32_0 = arith.constant 0 : i32
    %c0_i32_1 = arith.constant 0 : i32
    return %c0_i32, %c0_i32_0 : i32, i32
  }
  func.func @transform_6(%arg0: i32) -> (i32, i32) {
    %c0_i32 = arith.constant 0 : i32
    %c0_i32_0 = arith.constant 0 : i32
    %c0_i32_1 = arith.constant 0 : i32
    return %c0_i32, %c0_i32_0 : i32, i32
  }
  func.func @transform_7(%arg0: i32) -> (i32, i32) {
    %c0_i32 = arith.constant 0 : i32
    %c0_i32_0 = arith.constant 0 : i32
    return %arg0, %c0_i32 : i32, i32
  }
}

</mosaic_0001>

<llo_original>
// kernel: tpu_custom_call.1
$region0: #{tpu_custom_call.1}
  #allocation0 [shape = 'u32[]', space=smem, size = 0x4, offset = 0x4, fixed_abs, tag = 'smem constant byte address 0x4 - core index']
  #allocation1 [shape = 'u32[72,128]{1,0:T(1,128)}', space=vmem, size = 0x9000, scoped, tag = 'internal scratch']
  #allocation2 [shape = 'bf16[8,128]{1,0:T(8,128)(2,1)}', space=vmem, size = 0x800, scoped, tag = 'scratch operand']
  %s0 = inlined_call_operand.vmem [shape: f32[16,3], index: 0, kind: input, shape index: {}]
  %s1 = inlined_call_operand.vmem [shape: f32[3,128], index: 1, kind: input, shape index: {}]
  %s2 = inlined_call_operand.vmem [shape: f32[1,128], index: 2, kind: input, shape index: {}]
  %s3 = inlined_call_operand.hbm [shape: bf16[2,128,128], index: 3, kind: input, shape index: {}]
  %s4 = inlined_call_operand.vmem [shape: f32[2,1,128], index: 4, kind: input, shape index: {}]
  %s5 = inlined_call_operand.hbm [shape: bf16[128,128], index: 5, kind: input, shape index: {}]
  %s6 = inlined_call_operand.vmem [shape: f32[1,128], index: 6, kind: input, shape index: {}]
  %s7 = inlined_call_operand.hbm [shape: f32[16,128], index: 7, kind: output, shape index: {}]
  %s8 = sld [smem:[#allocation0]]
  $region69: #{tpu_custom_call.1} parent=0
    _
  %s10 = ssub.s32 1, %s8
  %s11 = scalar_select 0, %s10, %s8
  $region1: #{tpu_custom_call.1} parent=0
    #allocation3 [shape = 'u8[65536]{0}', space=vmem, size = 0x10000, scoped, tag = 'input window, operand 3, single buffered']
    #allocation4 [shape = 's32[2]{0}', space=sflag, size = 0x8, scoped, tag = 'scoped memory for tpu_custom_call.1']
    #allocation5 [shape = 's32[2]{0}', space=sflag, size = 0x8, scoped, tag = 'scoped memory for tpu_custom_call.1']
    #allocation6 [shape = 'u8[32768]{0}', space=vmem, size = 0x8000, scoped, tag = 'input window, operand 5, single buffered']
    #allocation7 [shape = 's32[1]{0}', space=sflag, size = 0x4, scoped, tag = 'scoped memory for tpu_custom_call.1']
    #allocation8 [shape = 'u8[8192]{0}', space=vmem, size = 0x2000, scoped, tag = 'output window, operand 0']
    %12 = vsyncpa [#allocation4], 0
    %13 = vsyncpa [#allocation7], 0
    %14 = vsyncpa [#allocation5], 0
    %s15 = scalar_lea.sflag [#allocation5], 1
    %16 = vsyncpa %s15, 0
    loop: start=0, step=1, limit=4
    $region2: #{tpu_custom_call.1} parent=1 // loop_pre_header
      _
    $region3: #{tpu_custom_call.1} parent=1 // loop_header
      %s18 = sphi 0, %s22
      %p19 = scmp.ge.s32.totalorder %s18, 4
      %s28 = sphi 0, %s30
      %s31 = sphi 0, %s28
      %s32 = sphi 0, %s31
      %s48 = sphi 0, %s32
      %s52 = sphi 0, %s52
      %s54 = sphi 0, %s52
      %s55 = sphi 0, %s54
      %s69 = sphi 0, %s55
      %s73 = sphi 0, %s73
      %s75 = sphi 0, %s73
      %s76 = sphi 0, %s75
      %s90 = sphi 0, %s76
      %s94 = sphi 0, %s94
      %s96 = sphi 0, %s94
      %s97 = sphi 0, %s96
      %s111 = sphi 0, %s97
      %s115 = sphi 0, %s115
      %s117 = sphi 0, %s115
      %s118 = sphi 0, %s117
      %s132 = sphi 0, %s118
      %s136 = sphi 0, %s136
      %s138 = sphi 0, %s136
      %s139 = sphi 0, %s138
      %s153 = sphi 0, %s139
      %s157 = sphi 0, %s157
      %s159 = sphi 0, %s157
      %s160 = sphi 0, %s159
      %s174 = sphi 0, %s160
      %s180 = sphi 0, %s182
      %s183 = sphi 0, %s180
      %s184 = sphi 0, %s183
      %s200 = sphi 0, %s184
    $region4: #{tpu_custom_call.1} parent=1 // loop_header_branch
      %21 = sbr.rel (%p19) target = $region8
    $region5: #{tpu_custom_call.1} parent=1 // loop_body
      %s23 = ssub.s32 %s18, 1
      %s24 = ssub.s32 %s18, 2
      %s25 = sadd.s32 %s18, 1
      %s26 = ssub.s32 %s18, %s25
      %p27 = scmp.eq.s32.totalorder %s26, 0
      %s29 = sadd.s32 %s28, 1
      %s30 = scalar_select %p27, %s28, %s29
      %p33 = pneg %p27
      %p34 = scmp.eq.s32.totalorder %s18, 1
      %p35 = por %p33, %p34
      %p36 = scmp.ne.s32.totalorder %s28, %s31
      %p37 = scmp.eq.s32.totalorder %s18, 0
      %p38 = por %p36, %p37
      %p39 = scmp.ne.s32.totalorder %s28, %s31
      %p40 = scmp.eq.s32.totalorder %s23, 1
      %p41 = por %p39, %p40
      %p42 = scmp.ne.s32.totalorder %s31, %s32
      %p43 = scmp.eq.s32.totalorder %s23, 0
      %p44 = por %p42, %p43
      %p45 = scmp.ne.s32.totalorder %s31, %s32
      %p46 = scmp.eq.s32.totalorder %s24, 1
      %p47 = por %p45, %p46
      %p49 = scmp.ne.s32.totalorder %s32, %s48
      %p50 = scmp.eq.s32.totalorder %s24, 0
      %p51 = por %p49, %p50
      %s53 = sadd.s32 %s52, 1
      %p56 = scmp.eq.s32.totalorder %s18, 1
      %p57 = scmp.ne.s32.totalorder %s52, %s54
      %p58 = scmp.eq.s32.totalorder %s18, 0
      %p59 = por %p57, %p58
      %p60 = scmp.ne.s32.totalorder %s52, %s54
      %p61 = scmp.eq.s32.totalorder %s23, 1
      %p62 = por %p60, %p61
      %p63 = scmp.ne.s32.totalorder %s54, %s55
      %p64 = scmp.eq.s32.totalorder %s23, 0
      %p65 = por %p63, %p64
      %p66 = scmp.ne.s32.totalorder %s54, %s55
      %p67 = scmp.eq.s32.totalorder %s24, 1
      %p68 = por %p66, %p67
      %p70 = scmp.ne.s32.totalorder %s55, %s69
      %p71 = scmp.eq.s32.totalorder %s24, 0
      %p72 = por %p70, %p71
      %s74 = sadd.s32 %s73, 1
      %p77 = scmp.eq.s32.totalorder %s18, 1
      %p78 = scmp.ne.s32.totalorder %s73, %s75
      %p79 = scmp.eq.s32.totalorder %s18, 0
      %p80 = por %p78, %p79
      %p81 = scmp.ne.s32.totalorder %s73, %s75
      %p82 = scmp.eq.s32.totalorder %s23, 1
      %p83 = por %p81, %p82
      %p84 = scmp.ne.s32.totalorder %s75, %s76
      %p85 = scmp.eq.s32.totalorder %s23, 0
      %p86 = por %p84, %p85
      %p87 = scmp.ne.s32.totalorder %s75, %s76
      %p88 = scmp.eq.s32.totalorder %s24, 1
      %p89 = por %p87, %p88
      %p91 = scmp.ne.s32.totalorder %s76, %s90
      %p92 = scmp.eq.s32.totalorder %s24, 0
      %p93 = por %p91, %p92
      %s95 = sadd.s32 %s94, 1
      %p98 = scmp.eq.s32.totalorder %s18, 1
      %p99 = scmp.ne.s32.totalorder %s94, %s96
      %p100 = scmp.eq.s32.totalorder %s18, 0
      %p101 = por %p99, %p100
      %p102 = scmp.ne.s32.totalorder %s94, %s96
      %p103 = scmp.eq.s32.totalorder %s23, 1
      %p104 = por %p102, %p103
      %p105 = scmp.ne.s32.totalorder %s96, %s97
      %p106 = scmp.eq.s32.totalorder %s23, 0
      %p107 = por %p105, %p106
      %p108 = scmp.ne.s32.totalorder %s96, %s97
      %p109 = scmp.eq.s32.totalorder %s24, 1
      %p110 = por %p108, %p109
      %p112 = scmp.ne.s32.totalorder %s97, %s111
      %p113 = scmp.eq.s32.totalorder %s24, 0
      %p114 = por %p112, %p113
      %s116 = sadd.s32 %s115, 1
      %p119 = scmp.eq.s32.totalorder %s18, 1
      %p120 = scmp.ne.s32.totalorder %s115, %s117
      %p121 = scmp.eq.s32.totalorder %s18, 0
      %p122 = por %p120, %p121
      %p123 = scmp.ne.s32.totalorder %s115, %s117
      %p124 = scmp.eq.s32.totalorder %s23, 1
      %p125 = por %p123, %p124
      %p126 = scmp.ne.s32.totalorder %s117, %s118
      %p127 = scmp.eq.s32.totalorder %s23, 0
      %p128 = por %p126, %p127
      %p129 = scmp.ne.s32.totalorder %s117, %s118
      %p130 = scmp.eq.s32.totalorder %s24, 1
      %p131 = por %p129, %p130
      %p133 = scmp.ne.s32.totalorder %s118, %s132
      %p134 = scmp.eq.s32.totalorder %s24, 0
      %p135 = por %p133, %p134
      %s137 = sadd.s32 %s136, 1
      %p140 = scmp.eq.s32.totalorder %s18, 1
      %p141 = scmp.ne.s32.totalorder %s136, %s138
      %p142 = scmp.eq.s32.totalorder %s18, 0
      %p143 = por %p141, %p142
      %p144 = scmp.ne.s32.totalorder %s136, %s138
      %p145 = scmp.eq.s32.totalorder %s23, 1
      %p146 = por %p144, %p145
      %p147 = scmp.ne.s32.totalorder %s138, %s139
      %p148 = scmp.eq.s32.totalorder %s23, 0
      %p149 = por %p147, %p148
      %p150 = scmp.ne.s32.totalorder %s138, %s139
      %p151 = scmp.eq.s32.totalorder %s24, 1
      %p152 = por %p150, %p151
      %p154 = scmp.ne.s32.totalorder %s139, %s153
      %p155 = scmp.eq.s32.totalorder %s24, 0
      %p156 = por %p154, %p155
      %s158 = sadd.s32 %s157, 1
      %p161 = scmp.eq.s32.totalorder %s18, 1
      %p162 = scmp.ne.s32.totalorder %s157, %s159
      %p163 = scmp.eq.s32.totalorder %s18, 0
      %p164 = por %p162, %p163
      %p165 = scmp.ne.s32.totalorder %s157, %s159
      %p166 = scmp.eq.s32.totalorder %s23, 1
      %p167 = por %p165, %p166
      %p168 = scmp.ne.s32.totalorder %s159, %s160
      %p169 = scmp.eq.s32.totalorder %s23, 0
      %p170 = por %p168, %p169
      %p171 = scmp.ne.s32.totalorder %s159, %s160
      %p172 = scmp.eq.s32.totalorder %s24, 1
      %p173 = por %p171, %p172
      %p175 = scmp.ne.s32.totalorder %s160, %s174
      %p176 = scmp.eq.s32.totalorder %s24, 0
      %p177 = por %p175, %p176
      %s178 = ssub.s32 %s18, %s25
      %p179 = scmp.eq.s32.totalorder %s178, 0
      %s181 = sadd.s32 %s180, 1
      %s182 = scalar_select %p179, %s180, %s181
      %p185 = pneg %p179
      %p186 = scmp.eq.s32.totalorder %s18, 1
      %p187 = por %p185, %p186
      %p188 = scmp.ne.s32.totalorder %s180, %s183
      %p189 = scmp.eq.s32.totalorder %s18, 0
      %p190 = por %p188, %p189
      %p191 = scmp.ne.s32.totalorder %s180, %s183
      %p192 = scmp.eq.s32.totalorder %s23, 1
      %p193 = por %p191, %p192
      %p194 = scmp.ne.s32.totalorder %s183, %s184
      %p195 = scmp.eq.s32.totalorder %s23, 0
      %p196 = por %p194, %p195
      %p197 = scmp.ne.s32.totalorder %s183, %s184
      %p198 = scmp.eq.s32.totalorder %s24, 1
      %p199 = por %p197, %p198
      %p201 = scmp.ne.s32.totalorder %s184, %s200
      %p202 = scmp.eq.s32.totalorder %s24, 0
      %p203 = por %p201, %p202
      %p204 = scmp.le.s32.totalorder 1, %s18
      %p205 = scmp.lt.s32.totalorder %s18, 3
      %p206 = pnand %p204, %p205
      %p207 = pneg %p206
      // Predicated region
      $region9: #{tpu_custom_call.1} parent=5 // pred_check
        _
      $region10: #{tpu_custom_call.1} parent=5 // pred_check_branch
        %209 = sbr.rel (%p206) target = $region12
      $region11: #{tpu_custom_call.1} parent=5 // pred_region
        %s210 = ssub.s32 %s18, 1
        // Predicated region
        $region13: #{tpu_custom_call.1} parent=11 // pred_check
          %p211 = pneg %p65
        $region14: #{tpu_custom_call.1} parent=11 // pred_check_branch
          %213 = sbr.rel (%p211) target = $region16
        $region15: #{tpu_custom_call.1} parent=11 // pred_region
          _
        $region16: #{tpu_custom_call.1} parent=11 // pred_fallthru
          _
        // Predicated region
        $region17: #{tpu_custom_call.1} parent=11 // pred_check
          %p214 = pneg %p86
        $region18: #{tpu_custom_call.1} parent=11 // pred_check_branch
          %216 = sbr.rel (%p214) target = $region20
        $region19: #{tpu_custom_call.1} parent=11 // pred_region
          _
        $region20: #{tpu_custom_call.1} parent=11 // pred_fallthru
          _
        // Predicated region
        $region21: #{tpu_custom_call.1} parent=11 // pred_check
          %p217 = pneg %p107
        $region22: #{tpu_custom_call.1} parent=11 // pred_check_branch
          %219 = sbr.rel (%p217) target = $region24
        $region23: #{tpu_custom_call.1} parent=11 // pred_region
          %221 = vsyncadd [#allocation4], 0
          %s222 = sshll.u32 %s3, 4
          %s223 = int_to_ptr.hbm [resolvable:$true] %s222
          %s224 = sshll.u32 [#allocation3], 4
          %s225 = int_to_ptr.vmem [resolvable:$true] %s224
          %230 = dma.hbm_to_vmem [thread:$0]  %s223, 2048, %s225, [#allocation4], 64, 64, 4
        $region24: #{tpu_custom_call.1} parent=11 // pred_fallthru
          _
        // Predicated region
        $region25: #{tpu_custom_call.1} parent=11 // pred_check
          %p231 = pneg %p128
        $region26: #{tpu_custom_call.1} parent=11 // pred_check_branch
          %233 = sbr.rel (%p231) target = $region28
        $region27: #{tpu_custom_call.1} parent=11 // pred_region
          _
        $region28: #{tpu_custom_call.1} parent=11 // pred_fallthru
          _
        // Predicated region
        $region29: #{tpu_custom_call.1} parent=11 // pred_check
          %p234 = pneg %p149
        $region30: #{tpu_custom_call.1} parent=11 // pred_check_branch
          %236 = sbr.rel (%p234) target = $region32
        $region31: #{tpu_custom_call.1} parent=11 // pred_region
          %238 = vsyncadd [#allocation7], 0
          %s239 = sshll.u32 %s5, 4
          %s240 = int_to_ptr.hbm [resolvable:$true] %s239
          %s241 = sshll.u32 [#allocation6], 4
          %s242 = int_to_ptr.vmem [resolvable:$true] %s241
          %247 = dma.hbm_to_vmem [thread:$0]  %s240, 1024, %s242, [#allocation7], 64, 64, 4
        $region32: #{tpu_custom_call.1} parent=11 // pred_fallthru
          _
        // Predicated region
        $region33: #{tpu_custom_call.1} parent=11 // pred_check
          %p248 = pneg %p170
        $region34: #{tpu_custom_call.1} parent=11 // pred_check_branch
          %250 = sbr.rel (%p248) target = $region36
        $region35: #{tpu_custom_call.1} parent=11 // pred_region
          _
        $region36: #{tpu_custom_call.1} parent=11 // pred_fallthru
          _
      $region12: #{tpu_custom_call.1} parent=5 // pred_fallthru
        _
      %p251 = scmp.lt.s32.totalorder %s18, 2
      // Predicated region
      $region37: #{tpu_custom_call.1} parent=5 // pred_check
        %p252 = pneg %p251
      $region38: #{tpu_custom_call.1} parent=5 // pred_check_branch
        %254 = sbr.rel (%p252) target = $region40
      $region39: #{tpu_custom_call.1} parent=5 // pred_region
        // Predicated region
        $region41: #{tpu_custom_call.1} parent=39 // pred_check
          %p255 = pneg %p38
        $region42: #{tpu_custom_call.1} parent=39 // pred_check_branch
          %257 = sbr.rel (%p255) target = $region44
        $region43: #{tpu_custom_call.1} parent=39 // pred_region
          %p258 = scmp.lt.s32.totalorder %s18, 1
          %s259 = scalar_select %p258, %s18, 1
          %s260 = smul.addr %s259, 8
          %s261 = scalar_lea.vmem %s0, %s260
        $region44: #{tpu_custom_call.1} parent=39 // pred_fallthru
          _
      $region40: #{tpu_custom_call.1} parent=5 // pred_fallthru
        _
      %p262 = scmp.le.s32.totalorder 1, %s18
      %p263 = scmp.lt.s32.totalorder %s18, 3
      %p264 = pnand %p262, %p263
      %p265 = pneg %p264
      // Predicated region
      $region45: #{tpu_custom_call.1} parent=5 // pred_check
        _
      $region46: #{tpu_custom_call.1} parent=5 // pred_check_branch
        %267 = sbr.rel (%p264) target = $region48
      $region47: #{tpu_custom_call.1} parent=5 // pred_region
        %s268 = ssub.s32 %s18, 1
        // Predicated region
        $region49: #{tpu_custom_call.1} parent=47 // pred_check
          %p269 = pneg %p107
        $region50: #{tpu_custom_call.1} parent=47 // pred_check_branch
          %271 = sbr.rel (%p269) target = $region52
        $region51: #{tpu_custom_call.1} parent=47 // pred_region
          %273 = dma.done [#allocation4], 2048
        $region52: #{tpu_custom_call.1} parent=47 // pred_fallthru
          _
        // Predicated region
        $region53: #{tpu_custom_call.1} parent=47 // pred_check
          %p274 = pneg %p149
        $region54: #{tpu_custom_call.1} parent=47 // pred_check_branch
          %276 = sbr.rel (%p274) target = $region56
        $region55: #{tpu_custom_call.1} parent=47 // pred_region
          %278 = dma.done [#allocation7], 1024
        $region56: #{tpu_custom_call.1} parent=47 // pred_fallthru
          _
        %p279 = scmp.lt.s32.totalorder %s23, 1
        %s280 = scalar_select %p279, %s23, 1
        %s281 = smul.addr %s280, 8
        %s282 = scalar_lea.vmem %s0, %s281
        %p283 = pneg %p44
        %p284 = pneg %p41
        %p285 = pneg %p65
        %p286 = pneg %p62
        %p287 = pneg %p86
        %p288 = pneg %p83
        %p289 = pneg %p107
        %p290 = pneg %p104
        %p291 = pneg %p128
        %p292 = pneg %p125
        %p293 = pneg %p149
        %p294 = pneg %p146
        %p295 = pneg %p170
        %p296 = pneg %p167
        %p297 = pneg %p196
        %p298 = pneg %p193
        %s299 = sand.u32 %s183, 1
        %s300 = scalar_lea.sflag [#allocation5], %s299
        %s301 = sand.u32 %s183, 1
        %s302 = smul.addr %s301, 8
        %s303 = scalar_lea.vmem [#allocation8], %s302
        %p304 = scmp.lt.s32.totalorder %s23, 1
        %s305 = scalar_select %p304, %s23, 1
        %s306 = smul.addr %s305, 8
        %s307 = scalar_lea.vmem %s0, %s306
        %v308 = vld [vmem:[%s307] sm:$0xff]
        %v309 = vld [vmem:[%s1] sm:$0x7]
        %v310 = vld [vmem:[%s2] sm:$0x1]
        %v312 = vperm.slane %v310, 0
        %vm314 = vcmask 23552
        %v316 = vsel %vm314, %v308, 0
        %vm318 = vcmask 1042432
        %v320 = vsel %vm318, %v309, 0
        %322 = vmatpush.msra.mxu0 0.0
        %323 = vmatpush.msra.mxu0 0.0
        %324 = vmatpush.msra.mxu0 0.0
        %325 = vmatpush.msra.mxu0 0.0
        %326 = vmatpush.msra.mxu0 0.0
        %327 = vmatpush.msra.mxu0 0.0
        %328 = vmatpush.msra.mxu0 0.0
        %329 = vmatpush.msra.mxu0 0.0
        %330 = vmatpush.msra.mxu0 0.0
        %331 = vmatpush.msra.mxu0 0.0
        %332 = vmatpush.msra.mxu0 0.0
        %333 = vmatpush.msra.mxu0 0.0
        %334 = vmatpush.msra.mxu0 0.0
        %335 = vmatpush.msra.mxu0 0.0
        %336 = vmatpush.msra.mxu0 0.0
        %337 = vmatpush.msra.mxu0 %v320
        %338 = vmatmul.f32.gmra.mxu0 %v316
        %v339 = vpop.f32.mrf.mxu0
        %v340 = vadd.f32 %v312, %v339
        %341 = vdwg.mxu0
        %v342 = vand.u32 2147483647, %v340
        %vm343 = vcmp.le.f32.partialorder %v342, 0.7853982
        %vm344 = vcmp.lt.s32.totalorder %v340, 0
        %v345 = vand.u32 %v340, 2139095040
        %v346 = vshrl.u32 %v345, 23
        %v347 = vsub.s32 %v346, 127
        %v348 = vand.u32 2147483647, %v340
        %v349 = vand.u32 %v348, 8388607
        %v350 = vor.u32 %v349, 8388608
        %v351 = vsub.s32 0, %v350
        %v352 = vadd.s32 %v347, 1
        %vm353 = vcmp.gt.s32.totalorder %v352, 0
        %v354 = vsel %vm353, %v352, 0
        %v355 = vshrl.u32 %v354, 5
        %v356 = vand.u32 %v354, 31
        %v357 = vsub.s32 32, %v356
        %v358 = vshrl.u32 683565275, %v357
        %v359 = vshll.u32 683565275, %v356
        %v360 = vshrl.u32 2475754826, %v357
        %v361 = vor.u32 %v359, %v360
        %v362 = vshll.u32 2475754826, %v356
        %v363 = vshrl.u32 2131351028, %v357
        %v364 = vor.u32 %v362, %v363
        %v365 = vshll.u32 2131351028, %v356
        %v366 = vshrl.u32 2102212464, %v357
        %v367 = vor.u32 %v365, %v366
        %v368 = vshll.u32 2102212464, %v356
        %v369 = vshrl.u32 920167782, %v357
        %v370 = vor.u32 %v368, %v369
        %v371 = vshll.u32 920167782, %v356
        %v372 = vshrl.u32 1326507024, %v357
        %v373 = vor.u32 %v371, %v372
        %vm374 = vcmp.lt.s32.totalorder %v355, 1
        %vm375 = vcmp.lt.s32.totalorder %v355, 2
        %vm376 = vcmp.lt.s32.totalorder %v355, 3
        %vm377 = vcmp.lt.s32.totalorder %v355, 4
        %v378 = vsel %vm374, %v358, %v361
        %v379 = vsel %vm377, %v367, 2102212464
        %v380 = vsel %vm376, %v364, %v379
        %v381 = vsel %vm375, %v378, %v380
        %v382 = vsel %vm374, %v361, %v364
        %v383 = vsel %vm377, %v370, 920167782
        %v384 = vsel %vm376, %v367, %v383
        %v385 = vsel %vm375, %v382, %v384
        %v386 = vsel %vm374, %v364, %v367
        %v387 = vsel %vm377, %v373, 1326507024
        %v388 = vsel %vm376, %v370, %v387
        %v389 = vsel %vm375, %v386, %v388
        %v390 = vshll.u32 %v350, 8
        %v391 = vand.u32 %v390, 65535
        %v392 = vshrl.u32 %v390, 16
        %v393 = vand.u32 %v389, 65535
        %v394 = vshrl.u32 %v389, 16
        %v395 = vmul.u32 %v391, %v393
        %v396 = vmul.u32 %v391, %v394
        %v397 = vmul.u32 %v392, %v393
        %v398 = vmul.u32 %v392, %v394
        %v399 = vshll.u32 %v396, 16
        %v400 = vshrl.u32 %v396, 16
        %v401 = vshll.u32 %v397, 16
        %v402 = vshrl.u32 %v397, 16
        %vm403 = vc.u32 %v395, %v399
        %v404 = vsel %vm403, 1, 0
        %v405 = vadd.s32 %v395, %v399
        %v406 = vadd.s32 %v398, %v404
        %vm407 = vc.u32 %v405, %v401
        %v408 = vsel %vm407, 1, 0
        %v409 = vadd.s32 %v405, %v401
        %v410 = vadd.s32 %v406, %v408
        %v411 = vadd.s32 %v410, %v400
        %v412 = vadd.s32 %v411, %v402
        %v413 = vand.u32 %v390, 65535
        %v414 = vshrl.u32 %v390, 16
        %v415 = vand.u32 %v385, 65535
        %v416 = vshrl.u32 %v385, 16
        %v417 = vmul.u32 %v413, %v415
        %v418 = vmul.u32 %v413, %v416
        %v419 = vmul.u32 %v414, %v415
        %v420 = vmul.u32 %v414, %v416
        %v421 = vshll.u32 %v418, 16
        %v422 = vshrl.u32 %v418, 16
        %v423 = vshll.u32 %v419, 16
        %v424 = vshrl.u32 %v419, 16
        %vm425 = vc.u32 %v417, %v421
        %v426 = vsel %vm425, 1, 0
        %v427 = vadd.s32 %v417, %v421
        %v428 = vadd.s32 %v420, %v426
        %vm429 = vc.u32 %v427, %v423
        %v430 = vsel %vm429, 1, 0
        %v431 = vadd.s32 %v427, %v423
        %v432 = vadd.s32 %v428, %v430
        %v433 = vadd.s32 %v432, %v422
        %v434 = vadd.s32 %v433, %v424
        %v435 = vmul.u32 %v390, %v381
        %v436 = vadd.s32 %v412, %v431
        %vm437 = vc.u32 %v412, %v431
        %v438 = vadd.s32 %v434, 1
        %v439 = vsel %vm437, %v438, %v434
        %v440 = vadd.s32 %v435, %v439
        %v441 = vadd.s32 %v440, 536870912
        %v442 = vshrl.u32 %v441, 30
        %v443 = vshll.u32 %v442, 30
        %v444 = vsub.s32 %v440, %v443
        %vm445 = vcmp.lt.s32.totalorder %v444, 0
        %v446 = vsub.s32 0, %v444
        %v447 = vsel %vm445, %v446, %v444
        %v448 = vclz %v447
        %v449 = vsub.s32 %v448, 2
        %vm450 = vcmp.gt.s32.totalorder 0, %v449
        %v451 = vsel %vm450, 0, %v449
        %v452 = vsub.s32 32, %v451
        %v453 = vshll.u32 %v444, %v451
        %v454 = vshrl.u32 %v436, %v452
        %v455 = vor.u32 %v453, %v454
        %v456 = vsub.s32 4294967266, %v451
        %v457 = vadd.s32 %v456, 127
        %v458 = vshll.u32 %v457, 23
        %v459 = vor.u32 4788187, %v458
        %v460 = vand.u32 2147483647, %v459
        %v462 = vcvt.s32.f32 %v455
        %v463 = vmul.f32 %v462, %v460
        %v464 = vxor.u32 %v463, 2147483648
        %v465 = vsel %vm344, %v464, %v463
        %v466 = vsub.s32 4, %v442
        %v467 = vsel %vm344, %v466, %v442
        %v468 = vsel %vm343, %v340, %v465
        %v469 = vsel %vm343, 0, %v467
        %v470 = vmul.f32 %v468, %v468
        %v471 = vmul.f32 %v470, -0.001358992
        %v472 = vadd.f32 %v471, 0.041655596
        %v473 = vmul.f32 %v470, %v472
        %v474 = vadd.f32 %v473, -0.4999988
        %v475 = vmul.f32 %v470, %v474
        %v476 = vadd.f32 1.0, %v475
        %v477 = vmul.f32 %v468, %v468
        %v478 = vmul.f32 %v477, -0.00019511016
        %v479 = vadd.f32 %v478, 0.008332121
        %v480 = vmul.f32 %v477, %v479
        %v481 = vadd.f32 %v480, -0.16666654
        %v482 = vmul.f32 %v477, %v481
        %v483 = vadd.f32 %v482, 1.0
        %v484 = vmul.f32 %v483, %v468
        %vm485 = vweird.f32 %v340
        %v486 = vadd.s32 %v469, 3
        %v487 = vand.u32 %v486, 3
        %vm488 = vcmp.lt.s32.totalorder %v487, 2
        %vm489 = vcmp.eq.s32.totalorder %v487, 0
        %v490 = vxor.u32 %v484, 2147483648
        %v491 = vsel %vm489, %v476, %v490
        %vm492 = vcmp.eq.s32.totalorder %v487, 2
        %v493 = vxor.u32 %v476, 2147483648
        %v494 = vsel %vm492, %v493, %v484
        %v495 = vsel %vm488, %v491, %v494
        %v496 = vsel %vm485, nan, %v495
        %v497 = vpack.c.bf16 %v496, %v496
        %498 = vst [vmem:[#allocation2] sm:$0xf] %v497
        %v499 = vld [vmem:[#allocation2] sm:$0xf]
        %v500 = vld [vmem:[#allocation3] sm:$0xf]
        %v501 = vld [vmem:[#allocation3 + $0x4] sm:$0xf]
        %v502 = vld [vmem:[#allocation3 + $0x8] sm:$0xf]
        %v503 = vld [vmem:[#allocation3 + $0xc] sm:$0xf]
        %v504 = vld [vmem:[#allocation3 + $0x10] sm:$0xf]
        %v505 = vld [vmem:[#allocation3 + $0x14] sm:$0xf]
        %v506 = vld [vmem:[#allocation3 + $0x18] sm:$0xf]
        %v507 = vld [vmem:[#allocation3 + $0x1c] sm:$0xf]
        %v508 = vld [vmem:[#allocation3 + $0x20] sm:$0xf]
        %v509 = vld [vmem:[#allocation3 + $0x24] sm:$0xf]
        %v510 = vld [vmem:[#allocation3 + $0x28] sm:$0xf]
        %v511 = vld [vmem:[#allocation3 + $0x2c] sm:$0xf]
        %v512 = vld [vmem:[#allocation3 + $0x30] sm:$0xf]
        %v513 = vld [vmem:[#allocation3 + $0x34] sm:$0xf]
        %v514 = vld [vmem:[#allocation3 + $0x38] sm:$0xf]
        %v515 = vld [vmem:[#allocation3 + $0x3c] sm:$0xf]
        %v516 = vld [vmem:[%s4] sm:$0x1]
        %v518 = vperm.slane %v516, 0
        %v536 = vunpack.c.l.b16 %v500
        %v537 = vunpack.c.l.b16 %v501
        %v538 = vunpack.c.l.b16 %v502
        %v539 = vunpack.c.l.b16 %v503
        %v540 = vunpack.c.l.b16 %v504
        %v541 = vunpack.c.l.b16 %v505
        %v542 = vunpack.c.l.b16 %v506
        %v543 = vunpack.c.l.b16 %v507
        %v544 = vunpack.c.l.b16 %v508
        %v545 = vunpack.c.l.b16 %v509
        %v546 = vunpack.c.l.b16 %v510
        %v547 = vunpack.c.l.b16 %v511
        %v548 = vunpack.c.l.b16 %v512
        %v549 = vunpack.c.l.b16 %v513
        %v550 = vunpack.c.l.b16 %v514
        %v551 = vunpack.c.l.b16 %v515
        %v552 = vpack.c.b16 %v537, %v536
        %v553 = vpack.c.b16 %v539, %v538
        %v554 = vpack.c.b16 %v541, %v540
        %v555 = vpack.c.b16 %v543, %v542
        %v556 = vpack.c.b16 %v545, %v544
        %v557 = vpack.c.b16 %v547, %v546
        %v558 = vpack.c.b16 %v549, %v548
        %v559 = vpack.c.b16 %v551, %v550
        %568 = vmatpush.bf16.msra.mxu0 %v559
        %569 = vmatpush.bf16.msra.mxu0 %v558
        %570 = vmatpush.bf16.msra.mxu0 %v557
        %571 = vmatpush.bf16.msra.mxu0 %v556
        %572 = vmatpush.bf16.msra.mxu0 %v555
        %573 = vmatpush.bf16.msra.mxu0 %v554
        %574 = vmatpush.bf16.msra.mxu0 %v553
        %575 = vmatpush.bf16.msra.mxu0 %v552
        %576 = vmatmul.bf16.gmra.mxu0 %v499
        %v577 = vpop.f32.mrf.mxu0
        %v578 = vadd.f32 %v518, %v577
        %v579 = vpop.f32.mrf.mxu0
        %580 = vdwg.mxu0
        %v581 = vand.u32 2147483647, %v578
        %vm582 = vcmp.le.f32.partialorder %v581, 0.7853982
        %vm583 = vcmp.lt.s32.totalorder %v578, 0
        %v584 = vand.u32 %v578, 2139095040
        %v585 = vshrl.u32 %v584, 23
        %v586 = vsub.s32 %v585, 127
        %v587 = vand.u32 2147483647, %v578
        %v588 = vand.u32 %v587, 8388607
        %v589 = vor.u32 %v588, 8388608
        %v590 = vsub.s32 0, %v589
        %v591 = vadd.s32 %v586, 1
        %vm592 = vcmp.gt.s32.totalorder %v591, 0
        %v593 = vsel %vm592, %v591, 0
        %v594 = vshrl.u32 %v593, 5
        %v595 = vand.u32 %v593, 31
        %v596 = vsub.s32 32, %v595
        %v597 = vshrl.u32 683565275, %v596
        %v598 = vshll.u32 683565275, %v595
        %v599 = vshrl.u32 2475754826, %v596
        %v600 = vor.u32 %v598, %v599
        %v601 = vshll.u32 2475754826, %v595
        %v602 = vshrl.u32 2131351028, %v596
        %v603 = vor.u32 %v601, %v602
        %v604 = vshll.u32 2131351028, %v595
        %v605 = vshrl.u32 2102212464, %v596
        %v606 = vor.u32 %v604, %v605
        %v607 = vshll.u32 2102212464, %v595
        %v608 = vshrl.u32 920167782, %v596
        %v609 = vor.u32 %v607, %v608
        %v610 = vshll.u32 920167782, %v595
        %v611 = vshrl.u32 1326507024, %v596
        %v612 = vor.u32 %v610, %v611
        %vm613 = vcmp.lt.s32.totalorder %v594, 1
        %vm614 = vcmp.lt.s32.totalorder %v594, 2
        %vm615 = vcmp.lt.s32.totalorder %v594, 3
        %vm616 = vcmp.lt.s32.totalorder %v594, 4
        %v617 = vsel %vm613, %v597, %v600
        %v618 = vsel %vm616, %v606, 2102212464
        %v619 = vsel %vm615, %v603, %v618
        %v620 = vsel %vm614, %v617, %v619
        %v621 = vsel %vm613, %v600, %v603
        %v622 = vsel %vm616, %v609, 920167782
        %v623 = vsel %vm615, %v606, %v622
        %v624 = vsel %vm614, %v621, %v623
        %v625 = vsel %vm613, %v603, %v606
        %v626 = vsel %vm616, %v612, 1326507024
        %v627 = vsel %vm615, %v609, %v626
        %v628 = vsel %vm614, %v625, %v627
        %v629 = vshll.u32 %v589, 8
        %v630 = vand.u32 %v629, 65535
        %v631 = vshrl.u32 %v629, 16
        %v632 = vand.u32 %v628, 65535
        %v633 = vshrl.u32 %v628, 16
        %v634 = vmul.u32 %v630, %v632
        %v635 = vmul.u32 %v630, %v633
        %v636 = vmul.u32 %v631, %v632
        %v637 = vmul.u32 %v631, %v633
        %v638 = vshll.u32 %v635, 16
        %v639 = vshrl.u32 %v635, 16
        %v640 = vshll.u32 %v636, 16
        %v641 = vshrl.u32 %v636, 16
        %vm642 = vc.u32 %v634, %v638
        %v643 = vsel %vm642, 1, 0
        %v644 = vadd.s32 %v634, %v638
        %v645 = vadd.s32 %v637, %v643
        %vm646 = vc.u32 %v644, %v640
        %v647 = vsel %vm646, 1, 0
        %v648 = vadd.s32 %v644, %v640
        %v649 = vadd.s32 %v645, %v647
        %v650 = vadd.s32 %v649, %v639
        %v651 = vadd.s32 %v650, %v641
        %v652 = vand.u32 %v629, 65535
        %v653 = vshrl.u32 %v629, 16
        %v654 = vand.u32 %v624, 65535
        %v655 = vshrl.u32 %v624, 16
        %v656 = vmul.u32 %v652, %v654
        %v657 = vmul.u32 %v652, %v655
        %v658 = vmul.u32 %v653, %v654
        %v659 = vmul.u32 %v653, %v655
        %v660 = vshll.u32 %v657, 16
        %v661 = vshrl.u32 %v657, 16
        %v662 = vshll.u32 %v658, 16
        %v663 = vshrl.u32 %v658, 16
        %vm664 = vc.u32 %v656, %v660
        %v665 = vsel %vm664, 1, 0
        %v666 = vadd.s32 %v656, %v660
        %v667 = vadd.s32 %v659, %v665
        %vm668 = vc.u32 %v666, %v662
        %v669 = vsel %vm668, 1, 0
        %v670 = vadd.s32 %v666, %v662
        %v671 = vadd.s32 %v667, %v669
        %v672 = vadd.s32 %v671, %v661
        %v673 = vadd.s32 %v672, %v663
        %v674 = vmul.u32 %v629, %v620
        %v675 = vadd.s32 %v651, %v670
        %vm676 = vc.u32 %v651, %v670
        %v677 = vadd.s32 %v673, 1
        %v678 = vsel %vm676, %v677, %v673
        %v679 = vadd.s32 %v674, %v678
        %v680 = vadd.s32 %v679, 536870912
        %v681 = vshrl.u32 %v680, 30
        %v682 = vshll.u32 %v681, 30
        %v683 = vsub.s32 %v679, %v682
        %vm684 = vcmp.lt.s32.totalorder %v683, 0
        %v685 = vsub.s32 0, %v683
        %v686 = vsel %vm684, %v685, %v683
        %v687 = vclz %v686
        %v688 = vsub.s32 %v687, 2
        %vm689 = vcmp.gt.s32.totalorder 0, %v688
        %v690 = vsel %vm689, 0, %v688
        %v691 = vsub.s32 32, %v690
        %v692 = vshll.u32 %v683, %v690
        %v693 = vshrl.u32 %v675, %v691
        %v694 = vor.u32 %v692, %v693
        %v695 = vsub.s32 4294967266, %v690
        %v696 = vadd.s32 %v695, 127
        %v697 = vshll.u32 %v696, 23
        %v698 = vor.u32 4788187, %v697
        %v699 = vand.u32 2147483647, %v698
        %v701 = vcvt.s32.f32 %v694
        %v702 = vmul.f32 %v701, %v699
        %v703 = vxor.u32 %v702, 2147483648
        %v704 = vsel %vm583, %v703, %v702
        %v705 = vsub.s32 4, %v681
        %v706 = vsel %vm583, %v705, %v681
        %v707 = vsel %vm582, %v578, %v704
        %v708 = vsel %vm582, 0, %v706
        %v709 = vmul.f32 %v707, %v707
        %v710 = vmul.f32 %v709, -0.001358992
        %v711 = vadd.f32 %v710, 0.041655596
        %v712 = vmul.f32 %v709, %v711
        %v713 = vadd.f32 %v712, -0.4999988
        %v714 = vmul.f32 %v709, %v713
        %v715 = vadd.f32 1.0, %v714
        %v716 = vmul.f32 %v707, %v707
        %v717 = vmul.f32 %v716, -0.00019511016
        %v718 = vadd.f32 %v717, 0.008332121
        %v719 = vmul.f32 %v716, %v718
        %v720 = vadd.f32 %v719, -0.16666654
        %v721 = vmul.f32 %v716, %v720
        %v722 = vadd.f32 %v721, 1.0
        %v723 = vmul.f32 %v722, %v707
        %vm724 = vweird.f32 %v578
        %v725 = vadd.s32 %v708, 3
        %v726 = vand.u32 %v725, 3
        %vm727 = vcmp.lt.s32.totalorder %v726, 2
        %vm728 = vcmp.eq.s32.totalorder %v726, 0
        %v729 = vxor.u32 %v723, 2147483648
        %v730 = vsel %vm728, %v715, %v729
        %vm731 = vcmp.eq.s32.totalorder %v726, 2
        %v732 = vxor.u32 %v715, 2147483648
        %v733 = vsel %vm731, %v732, %v723
        %v734 = vsel %vm727, %v730, %v733
        %v735 = vsel %vm724, nan, %v734
        %v736 = vpack.c.bf16 %v735, %v735
        %737 = vst [vmem:[#allocation2] sm:$0xf] %v736
        %v738 = vld [vmem:[#allocation2] sm:$0xf]
        %s739 = scalar_lea.vmem [#allocation3], 64
        %v740 = vld [vmem:[%s739] sm:$0xf]
        %v741 = vld [vmem:[%s739 + $0x4] sm:$0xf]
        %v742 = vld [vmem:[%s739 + $0x8] sm:$0xf]
        %v743 = vld [vmem:[%s739 + $0xc] sm:$0xf]
        %v744 = vld [vmem:[%s739 + $0x10] sm:$0xf]
        %v745 = vld [vmem:[%s739 + $0x14] sm:$0xf]
        %v746 = vld [vmem:[%s739 + $0x18] sm:$0xf]
        %v747 = vld [vmem:[%s739 + $0x1c] sm:$0xf]
        %v748 = vld [vmem:[%s739 + $0x20] sm:$0xf]
        %v749 = vld [vmem:[%s739 + $0x24] sm:$0xf]
        %v750 = vld [vmem:[%s739 + $0x28] sm:$0xf]
        %v751 = vld [vmem:[%s739 + $0x2c] sm:$0xf]
        %v752 = vld [vmem:[%s739 + $0x30] sm:$0xf]
        %v753 = vld [vmem:[%s739 + $0x34] sm:$0xf]
        %v754 = vld [vmem:[%s739 + $0x38] sm:$0xf]
        %v755 = vld [vmem:[%s739 + $0x3c] sm:$0xf]
        %s756 = scalar_lea.vmem %s4, 1
        %v757 = vld [vmem:[%s756] sm:$0x1]
        %v759 = vperm.slane %v757, 0
        %v777 = vunpack.c.l.b16 %v740
        %v778 = vunpack.c.l.b16 %v741
        %v779 = vunpack.c.l.b16 %v742
        %v780 = vunpack.c.l.b16 %v743
        %v781 = vunpack.c.l.b16 %v744
        %v782 = vunpack.c.l.b16 %v745
        %v783 = vunpack.c.l.b16 %v746
        %v784 = vunpack.c.l.b16 %v747
        %v785 = vunpack.c.l.b16 %v748
        %v786 = vunpack.c.l.b16 %v749
        %v787 = vunpack.c.l.b16 %v750
        %v788 = vunpack.c.l.b16 %v751
        %v789 = vunpack.c.l.b16 %v752
        %v790 = vunpack.c.l.b16 %v753
        %v791 = vunpack.c.l.b16 %v754
        %v792 = vunpack.c.l.b16 %v755
        %v793 = vpack.c.b16 %v778, %v777
        %v794 = vpack.c.b16 %v780, %v779
        %v795 = vpack.c.b16 %v782, %v781
        %v796 = vpack.c.b16 %v784, %v783
        %v797 = vpack.c.b16 %v786, %v785
        %v798 = vpack.c.b16 %v788, %v787
        %v799 = vpack.c.b16 %v790, %v789
        %v800 = vpack.c.b16 %v792, %v791
        %809 = vmatpush.bf16.msra.mxu0 %v800
        %810 = vmatpush.bf16.msra.mxu0 %v799
        %811 = vmatpush.bf16.msra.mxu0 %v798
        %812 = vmatpush.bf16.msra.mxu0 %v797
        %813 = vmatpush.bf16.msra.mxu0 %v796
        %814 = vmatpush.bf16.msra.mxu0 %v795
        %815 = vmatpush.bf16.msra.mxu0 %v794
        %816 = vmatpush.bf16.msra.mxu0 %v793
        %817 = vmatmul.bf16.gmra.mxu0 %v738
        %v818 = vpop.f32.mrf.mxu0
        %v819 = vadd.f32 %v759, %v818
        %v820 = vpop.f32.mrf.mxu0
        %821 = vdwg.mxu0
        %v822 = vand.u32 2147483647, %v819
        %vm823 = vcmp.le.f32.partialorder %v822, 0.7853982
        %vm824 = vcmp.lt.s32.totalorder %v819, 0
        %v825 = vand.u32 %v819, 2139095040
        %v826 = vshrl.u32 %v825, 23
        %v827 = vsub.s32 %v826, 127
        %v828 = vand.u32 2147483647, %v819
        %v829 = vand.u32 %v828, 8388607
        %v830 = vor.u32 %v829, 8388608
        %v831 = vsub.s32 0, %v830
        %v832 = vadd.s32 %v827, 1
        %vm833 = vcmp.gt.s32.totalorder %v832, 0
        %v834 = vsel %vm833, %v832, 0
        %v835 = vshrl.u32 %v834, 5
        %v836 = vand.u32 %v834, 31
        %v837 = vsub.s32 32, %v836
        %v838 = vshrl.u32 683565275, %v837
        %v839 = vshll.u32 683565275, %v836
        %v840 = vshrl.u32 2475754826, %v837
        %v841 = vor.u32 %v839, %v840
        %v842 = vshll.u32 2475754826, %v836
        %v843 = vshrl.u32 2131351028, %v837
        %v844 = vor.u32 %v842, %v843
        %v845 = vshll.u32 2131351028, %v836
        %v846 = vshrl.u32 2102212464, %v837
        %v847 = vor.u32 %v845, %v846
        %v848 = vshll.u32 2102212464, %v836
        %v849 = vshrl.u32 920167782, %v837
        %v850 = vor.u32 %v848, %v849
        %v851 = vshll.u32 920167782, %v836
        %v852 = vshrl.u32 1326507024, %v837
        %v853 = vor.u32 %v851, %v852
        %vm854 = vcmp.lt.s32.totalorder %v835, 1
        %vm855 = vcmp.lt.s32.totalorder %v835, 2
        %vm856 = vcmp.lt.s32.totalorder %v835, 3
        %vm857 = vcmp.lt.s32.totalorder %v835, 4
        %v858 = vsel %vm854, %v838, %v841
        %v859 = vsel %vm857, %v847, 2102212464
        %v860 = vsel %vm856, %v844, %v859
        %v861 = vsel %vm855, %v858, %v860
        %v862 = vsel %vm854, %v841, %v844
        %v863 = vsel %vm857, %v850, 920167782
        %v864 = vsel %vm856, %v847, %v863
        %v865 = vsel %vm855, %v862, %v864
        %v866 = vsel %vm854, %v844, %v847
        %v867 = vsel %vm857, %v853, 1326507024
        %v868 = vsel %vm856, %v850, %v867
        %v869 = vsel %vm855, %v866, %v868
        %v870 = vshll.u32 %v830, 8
        %v871 = vand.u32 %v870, 65535
        %v872 = vshrl.u32 %v870, 16
        %v873 = vand.u32 %v869, 65535
        %v874 = vshrl.u32 %v869, 16
        %v875 = vmul.u32 %v871, %v873
        %v876 = vmul.u32 %v871, %v874
        %v877 = vmul.u32 %v872, %v873
        %v878 = vmul.u32 %v872, %v874
        %v879 = vshll.u32 %v876, 16
        %v880 = vshrl.u32 %v876, 16
        %v881 = vshll.u32 %v877, 16
        %v882 = vshrl.u32 %v877, 16
        %vm883 = vc.u32 %v875, %v879
        %v884 = vsel %vm883, 1, 0
        %v885 = vadd.s32 %v875, %v879
        %v886 = vadd.s32 %v878, %v884
        %vm887 = vc.u32 %v885, %v881
        %v888 = vsel %vm887, 1, 0
        %v889 = vadd.s32 %v885, %v881
        %v890 = vadd.s32 %v886, %v888
        %v891 = vadd.s32 %v890, %v880
        %v892 = vadd.s32 %v891, %v882
        %v893 = vand.u32 %v870, 65535
        %v894 = vshrl.u32 %v870, 16
        %v895 = vand.u32 %v865, 65535
        %v896 = vshrl.u32 %v865, 16
        %v897 = vmul.u32 %v893, %v895
        %v898 = vmul.u32 %v893, %v896
        %v899 = vmul.u32 %v894, %v895
        %v900 = vmul.u32 %v894, %v896
        %v901 = vshll.u32 %v898, 16
        %v902 = vshrl.u32 %v898, 16
        %v903 = vshll.u32 %v899, 16
        %v904 = vshrl.u32 %v899, 16
        %vm905 = vc.u32 %v897, %v901
        %v906 = vsel %vm905, 1, 0
        %v907 = vadd.s32 %v897, %v901
        %v908 = vadd.s32 %v900, %v906
        %vm909 = vc.u32 %v907, %v903
        %v910 = vsel %vm909, 1, 0
        %v911 = vadd.s32 %v907, %v903
        %v912 = vadd.s32 %v908, %v910
        %v913 = vadd.s32 %v912, %v902
        %v914 = vadd.s32 %v913, %v904
        %v915 = vmul.u32 %v870, %v861
        %v916 = vadd.s32 %v892, %v911
        %vm917 = vc.u32 %v892, %v911
        %v918 = vadd.s32 %v914, 1
        %v919 = vsel %vm917, %v918, %v914
        %v920 = vadd.s32 %v915, %v919
        %v921 = vadd.s32 %v920, 536870912
        %v922 = vshrl.u32 %v921, 30
        %v923 = vshll.u32 %v922, 30
        %v924 = vsub.s32 %v920, %v923
        %vm925 = vcmp.lt.s32.totalorder %v924, 0
        %v926 = vsub.s32 0, %v924
        %v927 = vsel %vm925, %v926, %v924
        %v928 = vclz %v927
        %v929 = vsub.s32 %v928, 2
        %vm930 = vcmp.gt.s32.totalorder 0, %v929
        %v931 = vsel %vm930, 0, %v929
        %v932 = vsub.s32 32, %v931
        %v933 = vshll.u32 %v924, %v931
        %v934 = vshrl.u32 %v916, %v932
        %v935 = vor.u32 %v933, %v934
        %v936 = vsub.s32 4294967266, %v931
        %v937 = vadd.s32 %v936, 127
        %v938 = vshll.u32 %v937, 23
        %v939 = vor.u32 4788187, %v938
        %v940 = vand.u32 2147483647, %v939
        %v942 = vcvt.s32.f32 %v935
        %v943 = vmul.f32 %v942, %v940
        %v944 = vxor.u32 %v943, 2147483648
        %v945 = vsel %vm824, %v944, %v943
        %v946 = vsub.s32 4, %v922
        %v947 = vsel %vm824, %v946, %v922
        %v948 = vsel %vm823, %v819, %v945
        %v949 = vsel %vm823, 0, %v947
        %v950 = vmul.f32 %v948, %v948
        %v951 = vmul.f32 %v950, -0.001358992
        %v952 = vadd.f32 %v951, 0.041655596
        %v953 = vmul.f32 %v950, %v952
        %v954 = vadd.f32 %v953, -0.4999988
        %v955 = vmul.f32 %v950, %v954
        %v956 = vadd.f32 1.0, %v955
        %v957 = vmul.f32 %v948, %v948
        %v958 = vmul.f32 %v957, -0.00019511016
        %v959 = vadd.f32 %v958, 0.008332121
        %v960 = vmul.f32 %v957, %v959
        %v961 = vadd.f32 %v960, -0.16666654
        %v962 = vmul.f32 %v957, %v961
        %v963 = vadd.f32 %v962, 1.0
        %v964 = vmul.f32 %v963, %v948
        %vm965 = vweird.f32 %v819
        %v966 = vadd.s32 %v949, 3
        %v967 = vand.u32 %v966, 3
        %vm968 = vcmp.lt.s32.totalorder %v967, 2
        %vm969 = vcmp.eq.s32.totalorder %v967, 0
        %v970 = vxor.u32 %v964, 2147483648
        %v971 = vsel %vm969, %v956, %v970
        %vm972 = vcmp.eq.s32.totalorder %v967, 2
        %v973 = vxor.u32 %v956, 2147483648
        %v974 = vsel %vm972, %v973, %v964
        %v975 = vsel %vm968, %v971, %v974
        %v976 = vsel %vm965, nan, %v975
        %v977 = vpack.c.bf16 %v976, %v976
        %978 = vst [vmem:[#allocation2] sm:$0xf] %v977
        %v979 = vld [vmem:[#allocation2] sm:$0xf]
        %v980 = vld [vmem:[#allocation6] sm:$0xf]
        %v981 = vld [vmem:[#allocation6 + $0x4] sm:$0xf]
        %v982 = vld [vmem:[#allocation6 + $0x8] sm:$0xf]
        %v983 = vld [vmem:[#allocation6 + $0xc] sm:$0xf]
        %v984 = vld [vmem:[#allocation6 + $0x10] sm:$0xf]
        %v985 = vld [vmem:[#allocation6 + $0x14] sm:$0xf]
        %v986 = vld [vmem:[#allocation6 + $0x18] sm:$0xf]
        %v987 = vld [vmem:[#allocation6 + $0x1c] sm:$0xf]
        %v988 = vld [vmem:[#allocation6 + $0x20] sm:$0xf]
        %v989 = vld [vmem:[#allocation6 + $0x24] sm:$0xf]
        %v990 = vld [vmem:[#allocation6 + $0x28] sm:$0xf]
        %v991 = vld [vmem:[#allocation6 + $0x2c] sm:$0xf]
        %v992 = vld [vmem:[#allocation6 + $0x30] sm:$0xf]
        %v993 = vld [vmem:[#allocation6 + $0x34] sm:$0xf]
        %v994 = vld [vmem:[#allocation6 + $0x38] sm:$0xf]
        %v995 = vld [vmem:[#allocation6 + $0x3c] sm:$0xf]
        %v996 = vld [vmem:[%s6] sm:$0x1]
        %v998 = vperm.slane %v996, 0
        %v1016 = vunpack.c.l.b16 %v980
        %v1017 = vunpack.c.l.b16 %v981
        %v1018 = vunpack.c.l.b16 %v982
        %v1019 = vunpack.c.l.b16 %v983
        %v1020 = vunpack.c.l.b16 %v984
        %v1021 = vunpack.c.l.b16 %v985
        %v1022 = vunpack.c.l.b16 %v986
        %v1023 = vunpack.c.l.b16 %v987
        %v1024 = vunpack.c.l.b16 %v988
        %v1025 = vunpack.c.l.b16 %v989
        %v1026 = vunpack.c.l.b16 %v990
        %v1027 = vunpack.c.l.b16 %v991
        %v1028 = vunpack.c.l.b16 %v992
        %v1029 = vunpack.c.l.b16 %v993
        %v1030 = vunpack.c.l.b16 %v994
        %v1031 = vunpack.c.l.b16 %v995
        %v1032 = vpack.c.b16 %v1017, %v1016
        %v1033 = vpack.c.b16 %v1019, %v1018
        %v1034 = vpack.c.b16 %v1021, %v1020
        %v1035 = vpack.c.b16 %v1023, %v1022
        %v1036 = vpack.c.b16 %v1025, %v1024
        %v1037 = vpack.c.b16 %v1027, %v1026
        %v1038 = vpack.c.b16 %v1029, %v1028
        %v1039 = vpack.c.b16 %v1031, %v1030
        %1048 = vmatpush.bf16.msra.mxu0 %v1039
        %1049 = vmatpush.bf16.msra.mxu0 %v1038
        %1050 = vmatpush.bf16.msra.mxu0 %v1037
        %1051 = vmatpush.bf16.msra.mxu0 %v1036
        %1052 = vmatpush.bf16.msra.mxu0 %v1035
        %1053 = vmatpush.bf16.msra.mxu0 %v1034
        %1054 = vmatpush.bf16.msra.mxu0 %v1033
        %1055 = vmatpush.bf16.msra.mxu0 %v1032
        %1056 = vmatmul.bf16.gmra.mxu0 %v979
        %v1057 = vpop.f32.mrf.mxu0
        %v1058 = vadd.f32 %v998, %v1057
        %v1059 = vpop.f32.mrf.mxu0
        %1060 = vdwg.mxu0
        %1061 = vst [vmem:[%s303] sm:$0xff] %v1058
        %s1062 = sand.u32 %s183, 1
        %s1063 = scalar_lea.sflag [#allocation5], %s1062
        %s1064 = sand.u32 %s183, 1
        %s1065 = smul.addr %s1064, 8
        %s1066 = scalar_lea.vmem [#allocation8], %s1065
        // Predicated region
        $region57: #{tpu_custom_call.1} parent=47 // pred_check
          %p1067 = pneg %p193
        $region58: #{tpu_custom_call.1} parent=47 // pred_check_branch
          %1069 = sbr.rel (%p1067) target = $region60
        $region59: #{tpu_custom_call.1} parent=47 // pred_region
          %1071 = vsyncadd %s1063, 0
          %s1072 = smul.addr %s23, 8
          %s1073 = scalar_lea.hbm %s7, %s1072
          %s1075 = sshll.u32 %s1066, 4
          %s1076 = int_to_ptr.vmem [resolvable:$true] %s1075
          %s1077 = sshll.u32 %s1073, 4
          %s1078 = int_to_ptr.hbm [resolvable:$true] %s1077
          %1080 = dma.vmem_to_hbm [thread:$0]  %s1076, 128, %s1078, %s1063
        $region60: #{tpu_custom_call.1} parent=47 // pred_fallthru
          _
      $region48: #{tpu_custom_call.1} parent=5 // pred_fallthru
        _
      %p1081 = scmp.le.s32.totalorder 2, %s18
      // Predicated region
      $region61: #{tpu_custom_call.1} parent=5 // pred_check
        %p1082 = pneg %p1081
      $region62: #{tpu_custom_call.1} parent=5 // pred_check_branch
        %1084 = sbr.rel (%p1082) target = $region64
      $region63: #{tpu_custom_call.1} parent=5 // pred_region
        %s1085 = ssub.s32 %s18, 2
        // Predicated region
        $region65: #{tpu_custom_call.1} parent=63 // pred_check
          %p1086 = pneg %p199
        $region66: #{tpu_custom_call.1} parent=63 // pred_check_branch
          %1088 = sbr.rel (%p1086) target = $region68
        $region67: #{tpu_custom_call.1} parent=63 // pred_region
          %s1089 = sand.u32 %s184, 1
          %s1090 = scalar_lea.sflag [#allocation5], %s1089
          %s1091 = sand.u32 %s184, 1
          %s1092 = smul.addr %s1091, 8
          %s1093 = scalar_lea.vmem [#allocation8], %s1092
          %1095 = dma.done %s1090, 128
        $region68: #{tpu_custom_call.1} parent=63 // pred_fallthru
          _
      $region64: #{tpu_custom_call.1} parent=5 // pred_fallthru
        _
    $region6: #{tpu_custom_call.1} parent=1 // loop_footer
      %s22 = sadd.s32 1, %s18
    $region7: #{tpu_custom_call.1} parent=1 // loop_footer_branch
      %17 = sbr.rel target = $region3
    $region8: #{tpu_custom_call.1} parent=1 // loop_exit
      _
    %1096 = vsyncpa [#allocation4], 1
    %s1097 = scalar_lea.sflag [#allocation4], 1
    %1098 = vsyncpa %s1097, 1
    %1099 = vsyncpa [#allocation7], 1
    %1100 = vsyncpa [#allocation5], 1
    %s1101 = scalar_lea.sflag [#allocation5], 1
    %1102 = vsyncpa %s1101, 1

</llo_original>
